<compile_context>
chip_gen: v7x
topology: tpu7x:2x2x1
jax: 0.10.0
libtpu: 0.0.40
codegen_flags: <defaults>
</compile_context>

<pallas_src>
import jax
import jax.numpy as jnp
from jax import lax
from jax.experimental import pallas as pl
from jax.experimental.pallas import tpu as pltpu


def _round_up(x: int, m: int) -> int:
    return (x + m - 1) // m * m


def two_layer_kernel(x_ref, w1_ref, w2_ref, o_ref):
    # x_ref:  (TM, D_in_p)     current batch tile
    # w1_ref: (H_p, D_in_p)    PyTorch layout, VMEM-resident
    # w2_ref: (D_out_p, H_p)   PyTorch layout, VMEM-resident
    # hidden = relu(x @ W1^T): contract x dim 1 with w1 dim 1  -> (TM, H_p)
    h = lax.dot_general(
        x_ref[...], w1_ref[...],
        dimension_numbers=(((1,), (1,)), ((), ())),
        preferred_element_type=jnp.float32,
    )
    h = jnp.maximum(h, 0.0)  # clamp(min=0)
    # out = hidden @ W2^T: contract h dim 1 with w2 dim 1 -> (TM, D_out_p)
    o_ref[...] = lax.dot_general(
        h, w2_ref[...],
        dimension_numbers=(((1,), (1,)), ((), ())),
        preferred_element_type=jnp.float32,
    ).astype(o_ref.dtype)


def two_layer_net(x, w1, w2, *, tm: int = 512):
    """x: (N, D_in); w1: (H, D_in); w2: (D_out, H) -- PyTorch Linear weight layout."""
    N, D_in = x.shape
    H, _ = w1.shape
    D_out, _ = w2.shape

    # Lane-dense padding of feature dims; batch padded to the row-tile size.
    D_in_p = _round_up(D_in, 128)
    H_p = _round_up(H, 128)
    D_out_p = _round_up(D_out, 128)
    tm = min(tm, _round_up(N, 8))          # don't over-tile tiny batches
    N_p = _round_up(N, tm)

    x_p = jnp.pad(x, ((0, N_p - N), (0, D_in_p - D_in)))
    w1_p = jnp.pad(w1, ((0, H_p - H), (0, D_in_p - D_in)))
    w2_p = jnp.pad(w2, ((0, D_out_p - D_out), (0, H_p - H)))

    grid = (N_p // tm,)

    # VMEM budget: resident weights + double-buffered x/out tiles + live hidden.
    f32 = 4
    vmem_bytes = (
        H_p * D_in_p + D_out_p * H_p        # weights (single-buffered, resident)
        + 2 * tm * D_in_p                   # x tile, double-buffered
        + 2 * tm * D_out_p                  # out tile, double-buffered
        + tm * H_p                          # hidden activation (live in VMEM/vregs)
    ) * f32
    vmem_limit = int(min(max(2 * vmem_bytes, 32 * 1024 * 1024), 64 * 1024 * 1024))

    flops = 2 * N_p * D_in_p * H_p + 2 * N_p * H_p * D_out_p
    bytes_accessed = f32 * (
        N_p * D_in_p + H_p * D_in_p + D_out_p * H_p + N_p * D_out_p
    )

    out_p = pl.pallas_call(
        two_layer_kernel,
        out_shape=jax.ShapeDtypeStruct((N_p, D_out_p), x.dtype),
        grid_spec=pl.GridSpec(
            grid=grid,
            in_specs=[
                pl.BlockSpec((tm, D_in_p), lambda i: (i, 0)),      # stream x tiles
                pl.BlockSpec((H_p, D_in_p), lambda i: (0, 0)),     # W1 resident
                pl.BlockSpec((D_out_p, H_p), lambda i: (0, 0)),    # W2 resident
            ],
            out_specs=pl.BlockSpec((tm, D_out_p), lambda i: (i, 0)),
        ),
        compiler_params=pltpu.CompilerParams(
            dimension_semantics=("parallel",),   # shard batch tiles across TCs (v7x)
            vmem_limit_bytes=vmem_limit,
        ),
        cost_estimate=pl.CostEstimate(
            flops=flops, transcendentals=0, bytes_accessed=bytes_accessed
        ),
    )(x_p, w1_p, w2_p)

    # Slice off padding.
    return out_p[:N, :D_out]


if __name__ == "__main__":
    # Small shapes consistent with the module: N x D_in -> H -> D_out
    N, D_in, H, D_out = 8, 64, 128, 32

    key = jax.random.PRNGKey(0)
    kx, k1, k2 = jax.random.split(key, 3)

    x = jax.random.normal(kx, (N, D_in), dtype=jnp.float32)
    # PyTorch Linear weight shapes: (out_features, in_features)
    w1 = jax.random.normal(k1, (H, D_in), dtype=jnp.float32) * 0.1
    w2 = jax.random.normal(k2, (D_out, H), dtype=jnp.float32) * 0.1

    out = two_layer_net(x, w1, w2)
    out = jax.block_until_ready(out)

    # Reference check in plain JAX (matches the PyTorch forward).
    ref = jnp.maximum(x @ w1.T, 0.0) @ w2.T
    assert out.shape == (N, D_out)
    assert jnp.allclose(out, ref, atol=1e-5, rtol=1e-5)

    print("KERNEL_OK")
</pallas_src>

<mosaic_0001>
module attributes {stable_mosaic.version = 11 : i64} {
  func.func @two_layer_kernel(%arg0: i32, %arg1: memref<8x128xf32, #tpu.memory_space<vmem>>, %arg2: memref<128x128xf32, #tpu.memory_space<vmem>>, %arg3: memref<128x128xf32, #tpu.memory_space<vmem>>, %arg4: memref<8x128xf32, #tpu.memory_space<vmem>>) attributes {dimension_semantics = [#tpu.dimension_semantics<parallel>], iteration_bounds = array<i64: 1>, scalar_prefetch = 0 : i64, scratch_operands = 0 : i64, tpu.core_type = #tpu.core_type<tc>, window_params = [{transform_indices = @transform_0, window_bounds = array<i64: 8, 128>}, {pipeline_mode = #tpu.pipeline_mode<synchronous>, transform_indices = @transform_1, window_bounds = array<i64: 128, 128>}, {pipeline_mode = #tpu.pipeline_mode<synchronous>, transform_indices = @transform_2, window_bounds = array<i64: 128, 128>}, {transform_indices = @transform_3, window_bounds = array<i64: 8, 128>}]} {
    %c0 = arith.constant 0 : index
    %c0_0 = arith.constant 0 : index
    %0 = vector.load %arg1[%c0, %c0_0] : memref<8x128xf32, #tpu.memory_space<vmem>>, vector<8x128xf32>
    %c0_1 = arith.constant 0 : index
    %c0_2 = arith.constant 0 : index
    %1 = vector.load %arg2[%c0_1, %c0_2] : memref<128x128xf32, #tpu.memory_space<vmem>>, vector<128x128xf32>
    %cst = arith.constant dense<0.000000e+00> : vector<8x128xf32>
    %2 = tpu.matmul %0, %1, %cst {dimension_numbers = #tpu.dot_dimension_numbers<[1], [1], [0], [0], [0, 0, 1, 0], [], []>} : vector<8x128xf32>, vector<128x128xf32>, vector<8x128xf32> -> vector<8x128xf32>
    %cst_3 = arith.constant 0.000000e+00 : f32
    %3 = vector.broadcast %cst_3 : f32 to vector<8x128xf32>
    %4 = arith.maximumf %2, %3 : vector<8x128xf32>
    %c0_4 = arith.constant 0 : index
    %c0_5 = arith.constant 0 : index
    %5 = vector.load %arg3[%c0_4, %c0_5] : memref<128x128xf32, #tpu.memory_space<vmem>>, vector<128x128xf32>
    %cst_6 = arith.constant dense<0.000000e+00> : vector<8x128xf32>
    %6 = tpu.matmul %4, %5, %cst_6 {dimension_numbers = #tpu.dot_dimension_numbers<[1], [1], [0], [0], [0, 0, 1, 0], [], []>} : vector<8x128xf32>, vector<128x128xf32>, vector<8x128xf32> -> vector<8x128xf32>
    %c0_7 = arith.constant 0 : index
    %c0_8 = arith.constant 0 : index
    %7 = vector.load %arg4[%c0_7, %c0_8] : memref<8x128xf32, #tpu.memory_space<vmem>>, vector<8x128xf32>
    tpu.vector_store %arg4[%c0_7, %c0_8], %6 {strides = array<i32>} : memref<8x128xf32, #tpu.memory_space<vmem>>, vector<8x128xf32>,
    return
  }
  func.func @transform_0(%arg0: i32) -> (i32, i32) {
    %c0_i32 = arith.constant 0 : i32
    %c0_i32_0 = arith.constant 0 : i32
    return %arg0, %c0_i32 : i32, i32
  }
  func.func @transform_1(%arg0: i32) -> (i32, i32) {
    %c0_i32 = arith.constant 0 : i32
    %c0_i32_0 = arith.constant 0 : i32
    %c0_i32_1 = arith.constant 0 : i32
    return %c0_i32, %c0_i32_0 : i32, i32
  }
  func.func @transform_2(%arg0: i32) -> (i32, i32) {
    %c0_i32 = arith.constant 0 : i32
    %c0_i32_0 = arith.constant 0 : i32
    %c0_i32_1 = arith.constant 0 : i32
    return %c0_i32, %c0_i32_0 : i32, i32
  }
  func.func @transform_3(%arg0: i32) -> (i32, i32) {
    %c0_i32 = arith.constant 0 : i32
    %c0_i32_0 = arith.constant 0 : i32
    return %arg0, %c0_i32 : i32, i32
  }
}

</mosaic_0001>

<llo_original>
// kernel: tpu_custom_call.1
$region0: #{tpu_custom_call.1}
  #allocation0 [shape = 'u32[]', space=smem, size = 0x4, offset = 0x4, fixed_abs, tag = 'smem constant byte address 0x4 - core index']
  #allocation1 [shape = 'u32[144,128]{1,0:T(1,128)}', space=vmem, size = 0x12000, scoped, tag = 'internal scratch']
  %s0 = inlined_call_operand.hbm [shape: f32[8,128], index: 0, kind: input, shape index: {}]
  %s1 = inlined_call_operand.hbm [shape: f32[128,128], index: 1, kind: input, shape index: {}]
  %s2 = inlined_call_operand.hbm [shape: f32[128,128], index: 2, kind: input, shape index: {}]
  %s3 = inlined_call_operand.hbm [shape: f32[8,128], index: 3, kind: output, shape index: {}]
  %s4 = sld [smem:[#allocation0]]
  $region34: #{tpu_custom_call.1} parent=0
    _
  %s6 = ssub.s32 1, %s4
  %s7 = scalar_select 0, %s6, %s4
  $region1: #{tpu_custom_call.1} parent=0
    #allocation2 [shape = 'u8[4096]{0}', space=vmem, size = 0x1000, scoped, tag = 'input window, operand 0, single buffered']
    #allocation3 [shape = 's32[1]{0}', space=sflag, size = 0x4, scoped, tag = 'scoped memory for tpu_custom_call.1']
    #allocation4 [shape = 's32[1]{0}', space=sflag, size = 0x4, scoped, tag = 'scoped memory for tpu_custom_call.1']
    #allocation5 [shape = 'u8[65536]{0}', space=vmem, size = 0x10000, scoped, tag = 'input window, operand 1, single buffered']
    #allocation6 [shape = 's32[1]{0}', space=sflag, size = 0x4, scoped, tag = 'scoped memory for tpu_custom_call.1']
    #allocation7 [shape = 'u8[65536]{0}', space=vmem, size = 0x10000, scoped, tag = 'input window, operand 2, single buffered']
    #allocation8 [shape = 'u8[4096]{0}', space=vmem, size = 0x1000, scoped, tag = 'output window, operand 0, single buffered']
    %8 = vsyncpa [#allocation3], 0
    %9 = vsyncpa [#allocation6], 0
    %10 = vsyncpa [#allocation4], 0
    // Predicated region
    $region2: #{tpu_custom_call.1} parent=1 // pred_check
      _
    $region3: #{tpu_custom_call.1} parent=1 // pred_check_branch
      %12 = sbr.rel (0) target = $region5
    $region4: #{tpu_custom_call.1} parent=1 // pred_region
      %s14 = ssub.s32 128, 128
      %15 = vsyncadd [#allocation3], %s14
      %s17 = sshll.u32 [#allocation2], 4
      %s18 = int_to_ptr.vmem [resolvable:$true] %s17
      %20 = dma.hbm_to_vmem [thread:$0]  %s0, 128, %s18, [#allocation3]
    $region5: #{tpu_custom_call.1} parent=1 // pred_fallthru
      _
    // Predicated region
    $region6: #{tpu_custom_call.1} parent=1 // pred_check
      _
    $region7: #{tpu_custom_call.1} parent=1 // pred_check_branch
      %22 = sbr.rel (0) target = $region9
    $region8: #{tpu_custom_call.1} parent=1 // pred_region
      %s24 = ssub.s32 2048, 2048
      %25 = vsyncadd [#allocation6], %s24
      %s26 = sshll.u32 [#allocation5], 4
      %s27 = int_to_ptr.vmem [resolvable:$true] %s26
      %32 = dma.hbm_to_vmem [thread:$0]  %s1, 2048, %s27, [#allocation6], 128, 128, 8
    $region9: #{tpu_custom_call.1} parent=1 // pred_fallthru
      _
    // Predicated region
    $region10: #{tpu_custom_call.1} parent=1 // pred_check
      _
    $region11: #{tpu_custom_call.1} parent=1 // pred_check_branch
      %34 = sbr.rel (0) target = $region13
    $region12: #{tpu_custom_call.1} parent=1 // pred_region
      %s36 = ssub.s32 2048, 2048
      %37 = vsyncadd [#allocation6], %s36
      %s38 = sshll.u32 [#allocation7], 4
      %s39 = int_to_ptr.vmem [resolvable:$true] %s38
      %44 = dma.hbm_to_vmem [thread:$0]  %s2, 2048, %s39, [#allocation6], 128, 128, 8
    $region13: #{tpu_custom_call.1} parent=1 // pred_fallthru
      _
    // Predicated region
    $region14: #{tpu_custom_call.1} parent=1 // pred_check
      _
    $region15: #{tpu_custom_call.1} parent=1 // pred_check_branch
      %46 = sbr.rel (0) target = $region17
    $region16: #{tpu_custom_call.1} parent=1 // pred_region
      %47 = dma.done [#allocation3], 128
    $region17: #{tpu_custom_call.1} parent=1 // pred_fallthru
      _
    // Predicated region
    $region18: #{tpu_custom_call.1} parent=1 // pred_check
      _
    $region19: #{tpu_custom_call.1} parent=1 // pred_check_branch
      %49 = sbr.rel (0) target = $region21
    $region20: #{tpu_custom_call.1} parent=1 // pred_region
      %50 = dma.done [#allocation6], 2048
    $region21: #{tpu_custom_call.1} parent=1 // pred_fallthru
      _
    // Predicated region
    $region22: #{tpu_custom_call.1} parent=1 // pred_check
      _
    $region23: #{tpu_custom_call.1} parent=1 // pred_check_branch
      %52 = sbr.rel (0) target = $region25
    $region24: #{tpu_custom_call.1} parent=1 // pred_region
      %53 = dma.done [#allocation6], 2048
    $region25: #{tpu_custom_call.1} parent=1 // pred_fallthru
      _
    %v54 = vld [vmem:[#allocation2] sm:$0xff]
    %v55 = vld [vmem:[#allocation5] sm:$0xff]
    %v56 = vld [vmem:[#allocation5 + $0x8] sm:$0xff]
    %v57 = vld [vmem:[#allocation5 + $0x10] sm:$0xff]
    %v58 = vld [vmem:[#allocation5 + $0x18] sm:$0xff]
    %v59 = vld [vmem:[#allocation5 + $0x20] sm:$0xff]
    %v60 = vld [vmem:[#allocation5 + $0x28] sm:$0xff]
    %v61 = vld [vmem:[#allocation5 + $0x30] sm:$0xff]
    %v62 = vld [vmem:[#allocation5 + $0x38] sm:$0xff]
    %v63 = vld [vmem:[#allocation5 + $0x40] sm:$0xff]
    %v64 = vld [vmem:[#allocation5 + $0x48] sm:$0xff]
    %v65 = vld [vmem:[#allocation5 + $0x50] sm:$0xff]
    %v66 = vld [vmem:[#allocation5 + $0x58] sm:$0xff]
    %v67 = vld [vmem:[#allocation5 + $0x60] sm:$0xff]
    %v68 = vld [vmem:[#allocation5 + $0x68] sm:$0xff]
    %v69 = vld [vmem:[#allocation5 + $0x70] sm:$0xff]
    %v70 = vld [vmem:[#allocation5 + $0x78] sm:$0xff]
    %71 = vmatprep.subr.mxu0 0.0
    %72 = vmatpush1.xpose.msra.mxu0 %v55
    %73 = vmatprep.subr.mxu0 0.0
    %74 = vmatpush1.xpose.msra.mxu0 %v56
    %75 = vmatprep.subr.mxu0 0.0
    %76 = vmatpush1.xpose.msra.mxu0 %v57
    %77 = vmatprep.subr.mxu0 0.0
    %78 = vmatpush1.xpose.msra.mxu0 %v58
    %79 = vmatprep.subr.mxu0 0.0
    %80 = vmatpush1.xpose.msra.mxu0 %v59
    %81 = vmatprep.subr.mxu0 0.0
    %82 = vmatpush1.xpose.msra.mxu0 %v60
    %83 = vmatprep.subr.mxu0 0.0
    %84 = vmatpush1.xpose.msra.mxu0 %v61
    %85 = vmatprep.subr.mxu0 0.0
    %86 = vmatpush1.xpose.msra.mxu0 %v62
    %87 = vmatprep.subr.mxu0 0.0
    %88 = vmatpush1.xpose.msra.mxu0 %v63
    %89 = vmatprep.subr.mxu0 0.0
    %90 = vmatpush1.xpose.msra.mxu0 %v64
    %91 = vmatprep.subr.mxu0 0.0
    %92 = vmatpush1.xpose.msra.mxu0 %v65
    %93 = vmatprep.subr.mxu0 0.0
    %94 = vmatpush1.xpose.msra.mxu0 %v66
    %95 = vmatprep.subr.mxu0 0.0
    %96 = vmatpush1.xpose.msra.mxu0 %v67
    %97 = vmatprep.subr.mxu0 0.0
    %98 = vmatpush1.xpose.msra.mxu0 %v68
    %99 = vmatprep.subr.mxu0 0.0
    %100 = vmatpush1.xpose.msra.mxu0 %v69
    %101 = vmatprep.subr.mxu0 0.0
    %102 = vmatpush1.xpose.msra.mxu0 %v70
    %103 = vmatprep.subr.mxu0 0.0
    %104 = vmatpush1.xpose.msra.mxu0 0.0
    %105 = vmatprep.subr.mxu0 0.0
    %106 = vmatpush1.xpose.msra.mxu0 0.0
    %107 = vmatprep.subr.mxu0 0.0
    %108 = vmatpush1.xpose.msra.mxu0 0.0
    %109 = vmatprep.subr.mxu0 0.0
    %110 = vmatpush1.xpose.msra.mxu0 0.0
    %111 = vmatprep.subr.mxu0 0.0
    %112 = vmatpush1.xpose.msra.mxu0 0.0
    %113 = vmatprep.subr.mxu0 0.0
    %114 = vmatpush1.xpose.msra.mxu0 0.0
    %115 = vmatprep.subr.mxu0 0.0
    %116 = vmatpush1.xpose.msra.mxu0 0.0
    %117 = vmatprep.subr.mxu0 0.0
    %118 = vmatpush1.xpose.msra.mxu0 0.0
    %119 = vmatprep.subr.mxu0 0.0
    %120 = vmatpush1.xpose.msra.mxu0 0.0
    %121 = vmatprep.subr.mxu0 0.0
    %122 = vmatpush1.xpose.msra.mxu0 0.0
    %123 = vmatprep.subr.mxu0 0.0
    %124 = vmatpush1.xpose.msra.mxu0 0.0
    %125 = vmatprep.subr.mxu0 0.0
    %126 = vmatpush1.xpose.msra.mxu0 0.0
    %127 = vmatprep.subr.mxu0 0.0
    %128 = vmatpush1.xpose.msra.mxu0 0.0
    %129 = vmatprep.subr.mxu0 0.0
    %130 = vmatpush1.xpose.msra.mxu0 0.0
    %131 = vmatprep.subr.mxu0 0.0
    %132 = vmatpush1.xpose.msra.mxu0 0.0
    %133 = vmatprep.subr.mxu0 0.0
    %134 = vmatpush1.xpose.msra.mxu0 0.0
    %135 = vmatprep.mubr.f32.mxu0 0.0
    %136 = vmatmul.mubr.f32.gmra.mrb[0].mxu0 %v54
    %v137 = vpop.f32.mrb[0].mxu0
    %v138 = vadd.f32 0.0, %v137
    %v139 = vpop.f32.mrb[0].mxu0
    %140 = vdwg.mxu0
    %v141 = vmax.f32 %v138, 0.0
    %v142 = vld [vmem:[#allocation7] sm:$0xff]
    %v143 = vld [vmem:[#allocation7 + $0x8] sm:$0xff]
    %v144 = vld [vmem:[#allocation7 + $0x10] sm:$0xff]
    %v145 = vld [vmem:[#allocation7 + $0x18] sm:$0xff]
    %v146 = vld [vmem:[#allocation7 + $0x20] sm:$0xff]
    %v147 = vld [vmem:[#allocation7 + $0x28] sm:$0xff]
    %v148 = vld [vmem:[#allocation7 + $0x30] sm:$0xff]
    %v149 = vld [vmem:[#allocation7 + $0x38] sm:$0xff]
    %v150 = vld [vmem:[#allocation7 + $0x40] sm:$0xff]
    %v151 = vld [vmem:[#allocation7 + $0x48] sm:$0xff]
    %v152 = vld [vmem:[#allocation7 + $0x50] sm:$0xff]
    %v153 = vld [vmem:[#allocation7 + $0x58] sm:$0xff]
    %v154 = vld [vmem:[#allocation7 + $0x60] sm:$0xff]
    %v155 = vld [vmem:[#allocation7 + $0x68] sm:$0xff]
    %v156 = vld [vmem:[#allocation7 + $0x70] sm:$0xff]
    %v157 = vld [vmem:[#allocation7 + $0x78] sm:$0xff]
    %158 = vmatprep.subr.mxu0 0.0
    %159 = vmatpush1.xpose.msra.mxu0 %v142
    %160 = vmatprep.subr.mxu0 0.0
    %161 = vmatpush1.xpose.msra.mxu0 %v143
    %162 = vmatprep.subr.mxu0 0.0
    %163 = vmatpush1.xpose.msra.mxu0 %v144
    %164 = vmatprep.subr.mxu0 0.0
    %165 = vmatpush1.xpose.msra.mxu0 %v145
    %166 = vmatprep.subr.mxu0 0.0
    %167 = vmatpush1.xpose.msra.mxu0 %v146
    %168 = vmatprep.subr.mxu0 0.0
    %169 = vmatpush1.xpose.msra.mxu0 %v147
    %170 = vmatprep.subr.mxu0 0.0
    %171 = vmatpush1.xpose.msra.mxu0 %v148
    %172 = vmatprep.subr.mxu0 0.0
    %173 = vmatpush1.xpose.msra.mxu0 %v149
    %174 = vmatprep.subr.mxu0 0.0
    %175 = vmatpush1.xpose.msra.mxu0 %v150
    %176 = vmatprep.subr.mxu0 0.0
    %177 = vmatpush1.xpose.msra.mxu0 %v151
    %178 = vmatprep.subr.mxu0 0.0
    %179 = vmatpush1.xpose.msra.mxu0 %v152
    %180 = vmatprep.subr.mxu0 0.0
    %181 = vmatpush1.xpose.msra.mxu0 %v153
    %182 = vmatprep.subr.mxu0 0.0
    %183 = vmatpush1.xpose.msra.mxu0 %v154
    %184 = vmatprep.subr.mxu0 0.0
    %185 = vmatpush1.xpose.msra.mxu0 %v155
    %186 = vmatprep.subr.mxu0 0.0
    %187 = vmatpush1.xpose.msra.mxu0 %v156
    %188 = vmatprep.subr.mxu0 0.0
    %189 = vmatpush1.xpose.msra.mxu0 %v157
    %190 = vmatprep.subr.mxu0 0.0
    %191 = vmatpush1.xpose.msra.mxu0 0.0
    %192 = vmatprep.subr.mxu0 0.0
    %193 = vmatpush1.xpose.msra.mxu0 0.0
    %194 = vmatprep.subr.mxu0 0.0
    %195 = vmatpush1.xpose.msra.mxu0 0.0
    %196 = vmatprep.subr.mxu0 0.0
    %197 = vmatpush1.xpose.msra.mxu0 0.0
    %198 = vmatprep.subr.mxu0 0.0
    %199 = vmatpush1.xpose.msra.mxu0 0.0
    %200 = vmatprep.subr.mxu0 0.0
    %201 = vmatpush1.xpose.msra.mxu0 0.0
    %202 = vmatprep.subr.mxu0 0.0
    %203 = vmatpush1.xpose.msra.mxu0 0.0
    %204 = vmatprep.subr.mxu0 0.0
    %205 = vmatpush1.xpose.msra.mxu0 0.0
    %206 = vmatprep.subr.mxu0 0.0
    %207 = vmatpush1.xpose.msra.mxu0 0.0
    %208 = vmatprep.subr.mxu0 0.0
    %209 = vmatpush1.xpose.msra.mxu0 0.0
    %210 = vmatprep.subr.mxu0 0.0
    %211 = vmatpush1.xpose.msra.mxu0 0.0
    %212 = vmatprep.subr.mxu0 0.0
    %213 = vmatpush1.xpose.msra.mxu0 0.0
    %214 = vmatprep.subr.mxu0 0.0
    %215 = vmatpush1.xpose.msra.mxu0 0.0
    %216 = vmatprep.subr.mxu0 0.0
    %217 = vmatpush1.xpose.msra.mxu0 0.0
    %218 = vmatprep.subr.mxu0 0.0
    %219 = vmatpush1.xpose.msra.mxu0 0.0
    %220 = vmatprep.subr.mxu0 0.0
    %221 = vmatpush1.xpose.msra.mxu0 0.0
    %222 = vmatprep.mubr.f32.mxu0 0.0
    %223 = vmatmul.mubr.f32.gmra.mrb[0].mxu0 %v141
    %v224 = vpop.f32.mrb[0].mxu0
    %v225 = vadd.f32 0.0, %v224
    %v226 = vpop.f32.mrb[0].mxu0
    %227 = vdwg.mxu0
    %228 = vst [vmem:[#allocation8] sm:$0xff] %v225
    // Predicated region
    $region26: #{tpu_custom_call.1} parent=1 // pred_check
      _
    $region27: #{tpu_custom_call.1} parent=1 // pred_check_branch
      %230 = sbr.rel (0) target = $region29
    $region28: #{tpu_custom_call.1} parent=1 // pred_region
      %s232 = ssub.s32 128, 128
      %233 = vsyncadd [#allocation4], %s232
      %s235 = sshll.u32 [#allocation8], 4
      %s236 = int_to_ptr.vmem [resolvable:$true] %s235
      %238 = dma.vmem_to_hbm [thread:$0]  %s236, 128, %s3, [#allocation4]
    $region29: #{tpu_custom_call.1} parent=1 // pred_fallthru
      _
    // Predicated region
    $region30: #{tpu_custom_call.1} parent=1 // pred_check
      _
    $region31: #{tpu_custom_call.1} parent=1 // pred_check_branch
      %240 = sbr.rel (0) target = $region33
    $region32: #{tpu_custom_call.1} parent=1 // pred_region
      %241 = dma.done [#allocation4], 128
    $region33: #{tpu_custom_call.1} parent=1 // pred_fallthru
      _
    %242 = vsyncpa [#allocation3], 1
    %243 = vsyncpa [#allocation6], 1
    %244 = vsyncpa [#allocation4], 1

</llo_original>
